<compile_context>
chip_gen: v7x
topology: tpu7x:2x2x1
jax: 0.10.0
libtpu: 0.0.40
codegen_flags: <defaults>
</compile_context>

<pallas_src>
import jax
import jax.numpy as jnp
from jax.experimental import pallas as pl
from jax.experimental.pallas import tpu as pltpu

NEG_SLOPE = 0.01  # nn.LeakyReLU() default negative_slope
H0, H1 = 256, 128  # fc0 / fc1 widths


def _leaky_relu(x):
    return jnp.where(x > 0, x, NEG_SLOPE * x)


def _round_up(x, m):
    return ((x + m - 1) // m) * m


def pointwise_head_kernel(x_ref, md_ref, w0x_ref, w0md_ref, b0_ref,
                          w1_ref, b1_ref, w2_ref, b2_ref, o_ref):
    """Per-tile 3-layer MLP.

    x_ref:   (TILE, dim)   activation rows
    md_ref:  (TILE, 1)     per-row md_pct value
    w0x_ref: (dim, 256), w0md_ref: (1, 256), b0_ref: (1, 256)
    w1_ref:  (256, 128), b1_ref: (1, 128)
    w2_ref:  (1, 128)  (transposed `top` weight), b2_ref: (1, 1)
    o_ref:   (TILE, 1)
    """
    x = x_ref[...]
    md = md_ref[...]

    # fc0: concat([x, md]) @ W0  ==  x @ W0[:dim] + md * W0[dim]
    h = jnp.dot(x, w0x_ref[...], preferred_element_type=jnp.float32)
    h = h + md * w0md_ref[...] + b0_ref[...]
    h = _leaky_relu(h)
    # dropout(p=0.1) -> identity at inference

    # fc1
    h = jnp.dot(h, w1_ref[...], preferred_element_type=jnp.float32) + b1_ref[...]
    h = _leaky_relu(h)

    # top (128 -> 1): VPU multiply + lane reduction instead of a padded MXU matmul
    o = jnp.sum(h * w2_ref[...], axis=-1, keepdims=True) + b2_ref[...]
    o_ref[...] = o.astype(o_ref.dtype)


def init_params(key, dim):
    """Deterministic PyTorch-Linear-style init. Weights stored as (in, out)."""
    def linear(key, fan_in, fan_out):
        kw, kb = jax.random.split(key)
        bound = 1.0 / jnp.sqrt(jnp.float32(fan_in))
        w = jax.random.uniform(kw, (fan_in, fan_out), jnp.float32, -bound, bound)
        b = jax.random.uniform(kb, (1, fan_out), jnp.float32, -bound, bound)
        return w, b

    k0, k1, k2 = jax.random.split(key, 3)
    w0, b0 = linear(k0, dim + 1, H0)
    w1, b1 = linear(k1, H0, H1)
    w2, b2 = linear(k2, H1, 1)
    return (w0, b0, w1, b1, w2, b2)


def pointwise_head(x, md_pct, params, tile_n=512):
    """x: (B, S, dim) float32, md_pct: (B, 1) float32 -> (B, S-2) float32."""
    B, S, dim = x.shape
    Sm = S - 2
    w0, b0, w1, b1, w2, b2 = params

    # Split fc0 weight so the md column never has to be concatenated into x.
    w0_x = w0[:dim]                      # (dim, 256)
    w0_md = w0[dim:dim + 1]              # (1, 256)
    w2_row = w2.T                        # (1, 128)

    # Process all B*S rows (free contiguous reshape, no slice copy of x);
    # rows 0 and S-1 of each batch are computed and discarded below.
    N = B * S
    x2 = x.reshape(N, dim).astype(jnp.float32)
    md_rows = jnp.broadcast_to(md_pct[:, None, :], (B, S, 1)) \
                 .reshape(N, 1).astype(jnp.float32)

    # Tile rows; shrink the tile for tiny inputs, keep sublane-aligned (mult of 8).
    tile = min(tile_n, _round_up(N, 8))
    n_pad = pl.cdiv(N, tile) * tile
    if n_pad != N:  # ragged tail: pad rows (reviewer-sanctioned; no-op when divisible)
        pad = n_pad - N
        x2 = jnp.pad(x2, ((0, pad), (0, 0)))
        md_rows = jnp.pad(md_rows, ((0, pad), (0, 0)))
    grid = (n_pad // tile,)

    flops = (2 * n_pad * dim * H0          # fc0 matmul
             + 3 * n_pad * H0              # md outer product + bias + act
             + 2 * n_pad * H0 * H1         # fc1 matmul
             + 2 * n_pad * H1              # bias + act
             + 2 * n_pad * H1)             # top reduce
    bytes_accessed = (n_pad * dim * 4 + n_pad * 4 + n_pad * 4
                      + ((dim + 1) * H0 + H0 * H1 + H1 + H0 + H1 + 1) * 4)
    cost = pl.CostEstimate(flops=int(flops), transcendentals=0,
                           bytes_accessed=int(bytes_accessed))

    const = lambda i: (0, 0)   # weights/biases: resident across all grid steps

    out = pl.pallas_call(
        pointwise_head_kernel,
        out_shape=jax.ShapeDtypeStruct((n_pad, 1), jnp.float32),
        grid_spec=pltpu.PrefetchScalarGridSpec(
            num_scalar_prefetch=0,
            grid=grid,
            in_specs=[
                pl.BlockSpec((tile, dim), lambda i: (i, 0)),   # x rows
                pl.BlockSpec((tile, 1), lambda i: (i, 0)),     # md per row
                pl.BlockSpec((dim, H0), const),                # w0_x
                pl.BlockSpec((1, H0), const),                  # w0_md
                pl.BlockSpec((1, H0), const),                  # b0
                pl.BlockSpec((H0, H1), const),                 # w1
                pl.BlockSpec((1, H1), const),                  # b1
                pl.BlockSpec((1, H1), const),                  # w2 (row)
                pl.BlockSpec((1, 1), const),                   # b2
            ],
            out_specs=pl.BlockSpec((tile, 1), lambda i: (i, 0)),
        ),
        compiler_params=pltpu.CompilerParams(
            dimension_semantics=("parallel",),
            vmem_limit_bytes=32 * 1024 * 1024,
        ),
        cost_estimate=cost,
    )(x2, md_rows, w0_x, w0_md, b0, w1, b1, w2_row, b2)

    # Drop padded rows, reshape to (B, S), apply the 1:-1 slice on the tiny output.
    return out[:N, 0].reshape(B, S)[:, 1:-1]


def pointwise_head_ref(x, md_pct, params):
    """Pure-JAX reference mirroring the PyTorch module."""
    w0, b0, w1, b1, w2, b2 = params
    B, S, dim = x.shape
    xc = x[:, 1:-1, :]
    md = jnp.broadcast_to(md_pct[:, None, :], (B, S - 2, 1))
    h = jnp.concatenate([xc, md], axis=-1)
    h = _leaky_relu(h @ w0 + b0)
    h = _leaky_relu(h @ w1 + b1)
    o = h @ w2 + b2
    return o[..., 0]


if __name__ == "__main__":
    B, S, dim = 2, 8, 32
    key = jax.random.PRNGKey(0)
    kx, kmd, kp = jax.random.split(key, 3)

    x = jax.random.normal(kx, (B, S, dim), jnp.float32)
    md_pct = jax.random.uniform(kmd, (B, 1), jnp.float32)
    params = init_params(kp, dim)

    out = pointwise_head(x, md_pct, params)
    out = jax.block_until_ready(out)

    ref = pointwise_head_ref(x, md_pct, params)
    assert out.shape == (B, S - 2)
    assert jnp.allclose(out, ref, atol=1e-4, rtol=1e-4), \
        f"max abs err = {jnp.max(jnp.abs(out - ref))}"

    print("KERNEL_OK")
</pallas_src>

<mosaic_0001>
module attributes {stable_mosaic.version = 11 : i64} {
  func.func @pointwise_head_kernel(%arg0: i32, %arg1: memref<16x32xf32, #tpu.memory_space<vmem>>, %arg2: memref<16x1xf32, #tpu.memory_space<vmem>>, %arg3: memref<32x256xf32, #tpu.memory_space<vmem>>, %arg4: memref<1x256xf32, #tpu.memory_space<vmem>>, %arg5: memref<1x256xf32, #tpu.memory_space<vmem>>, %arg6: memref<256x128xf32, #tpu.memory_space<vmem>>, %arg7: memref<1x128xf32, #tpu.memory_space<vmem>>, %arg8: memref<1x128xf32, #tpu.memory_space<vmem>>, %arg9: memref<1x1xf32, #tpu.memory_space<vmem>>, %arg10: memref<16x1xf32, #tpu.memory_space<vmem>>) attributes {dimension_semantics = [#tpu.dimension_semantics<parallel>], iteration_bounds = array<i64: 1>, scalar_prefetch = 0 : i64, scratch_operands = 0 : i64, tpu.core_type = #tpu.core_type<tc>, window_params = [{transform_indices = @transform_0, window_bounds = array<i64: 16, 32>}, {transform_indices = @transform_1, window_bounds = array<i64: 16, 1>}, {pipeline_mode = #tpu.pipeline_mode<synchronous>, transform_indices = @transform_2, window_bounds = array<i64: 32, 256>}, {pipeline_mode = #tpu.pipeline_mode<synchronous>, transform_indices = @transform_3, window_bounds = array<i64: 1, 256>}, {pipeline_mode = #tpu.pipeline_mode<synchronous>, transform_indices = @transform_4, window_bounds = array<i64: 1, 256>}, {pipeline_mode = #tpu.pipeline_mode<synchronous>, transform_indices = @transform_5, window_bounds = array<i64: 256, 128>}, {pipeline_mode = #tpu.pipeline_mode<synchronous>, transform_indices = @transform_6, window_bounds = array<i64: 1, 128>}, {pipeline_mode = #tpu.pipeline_mode<synchronous>, transform_indices = @transform_7, window_bounds = array<i64: 1, 128>}, {pipeline_mode = #tpu.pipeline_mode<synchronous>, transform_indices = @transform_8, window_bounds = array<i64: 1, 1>}, {transform_indices = @transform_9, window_bounds = array<i64: 16, 1>}]} {
    %c0 = arith.constant 0 : index
    %c0_0 = arith.constant 0 : index
    %0 = vector.load %arg1[%c0, %c0_0] : memref<16x32xf32, #tpu.memory_space<vmem>>, vector<16x32xf32>
    %c0_1 = arith.constant 0 : index
    %c0_2 = arith.constant 0 : index
    %1 = vector.load %arg2[%c0_1, %c0_2] : memref<16x1xf32, #tpu.memory_space<vmem>>, vector<16x1xf32>
    %c0_3 = arith.constant 0 : index
    %c0_4 = arith.constant 0 : index
    %2 = vector.load %arg3[%c0_3, %c0_4] : memref<32x256xf32, #tpu.memory_space<vmem>>, vector<32x256xf32>
    %cst = arith.constant dense<0.000000e+00> : vector<16x256xf32>
    %3 = tpu.matmul %0, %2, %cst {dimension_numbers = #tpu.dot_dimension_numbers<[1], [0], [0], [1], [0, 0, 1, 1], [], []>} : vector<16x32xf32>, vector<32x256xf32>, vector<16x256xf32> -> vector<16x256xf32>
    %c0_5 = arith.constant 0 : index
    %c0_6 = arith.constant 0 : index
    %4 = vector.load %arg4[%c0_5, %c0_6] : memref<1x256xf32, #tpu.memory_space<vmem>>, vector<1x256xf32>
    %5 = vector.broadcast %1 : vector<16x1xf32> to vector<16x256xf32>
    %6 = vector.broadcast %4 : vector<1x256xf32> to vector<16x256xf32>
    %7 = arith.mulf %5, %6 : vector<16x256xf32>
    %8 = arith.addf %3, %7 : vector<16x256xf32>
    %c0_7 = arith.constant 0 : index
    %c0_8 = arith.constant 0 : index
    %9 = vector.load %arg5[%c0_7, %c0_8] : memref<1x256xf32, #tpu.memory_space<vmem>>, vector<1x256xf32>
    %10 = vector.broadcast %9 : vector<1x256xf32> to vector<16x256xf32>
    %11 = arith.addf %8, %10 : vector<16x256xf32>
    %cst_9 = arith.constant 0.000000e+00 : f32
    %12 = vector.broadcast %cst_9 : f32 to vector<16x256xf32>
    %13 = arith.cmpf ogt, %11, %12 : vector<16x256xf32>
    %cst_10 = arith.constant 0.00999999977 : f32
    %14 = vector.broadcast %cst_10 : f32 to vector<16x256xf32>
    %15 = arith.mulf %14, %11 : vector<16x256xf32>
    %16 = arith.select %13, %11, %15 : vector<16x256xi1>, vector<16x256xf32>
    %c0_11 = arith.constant 0 : index
    %c0_12 = arith.constant 0 : index
    %17 = vector.load %arg6[%c0_11, %c0_12] : memref<256x128xf32, #tpu.memory_space<vmem>>, vector<256x128xf32>
    %cst_13 = arith.constant dense<0.000000e+00> : vector<16x128xf32>
    %18 = tpu.matmul %16, %17, %cst_13 {dimension_numbers = #tpu.dot_dimension_numbers<[1], [0], [0], [1], [0, 0, 1, 1], [], []>} : vector<16x256xf32>, vector<256x128xf32>, vector<16x128xf32> -> vector<16x128xf32>
    %c0_14 = arith.constant 0 : index
    %c0_15 = arith.constant 0 : index
    %19 = vector.load %arg7[%c0_14, %c0_15] : memref<1x128xf32, #tpu.memory_space<vmem>>, vector<1x128xf32>
    %20 = vector.broadcast %19 : vector<1x128xf32> to vector<16x128xf32>
    %21 = arith.addf %18, %20 : vector<16x128xf32>
    %cst_16 = arith.constant 0.000000e+00 : f32
    %22 = vector.broadcast %cst_16 : f32 to vector<16x128xf32>
    %23 = arith.cmpf ogt, %21, %22 : vector<16x128xf32>
    %cst_17 = arith.constant 0.00999999977 : f32
    %24 = vector.broadcast %cst_17 : f32 to vector<16x128xf32>
    %25 = arith.mulf %24, %21 : vector<16x128xf32>
    %26 = arith.select %23, %21, %25 : vector<16x128xi1>, vector<16x128xf32>
    %c0_18 = arith.constant 0 : index
    %c0_19 = arith.constant 0 : index
    %27 = vector.load %arg8[%c0_18, %c0_19] : memref<1x128xf32, #tpu.memory_space<vmem>>, vector<1x128xf32>
    %28 = vector.broadcast %27 : vector<1x128xf32> to vector<16x128xf32>
    %29 = arith.mulf %26, %28 : vector<16x128xf32>
    %cst_20 = arith.constant dense<0.000000e+00> : vector<16xf32>
    %30 = vector.multi_reduction <add>, %29, %cst_20 [1] : vector<16x128xf32> to vector<16xf32>
    %31 = vector.shape_cast %30 : vector<16xf32> to vector<16x1xf32>
    %c0_21 = arith.constant 0 : index
    %c0_22 = arith.constant 0 : index
    %32 = vector.load %arg9[%c0_21, %c0_22] : memref<1x1xf32, #tpu.memory_space<vmem>>, vector<1x1xf32>
    %33 = vector.broadcast %32 : vector<1x1xf32> to vector<16x1xf32>
    %34 = arith.addf %31, %33 : vector<16x1xf32>
    %c0_23 = arith.constant 0 : index
    %c0_24 = arith.constant 0 : index
    %35 = vector.load %arg10[%c0_23, %c0_24] : memref<16x1xf32, #tpu.memory_space<vmem>>, vector<16x1xf32>
    tpu.vector_store %arg10[%c0_23, %c0_24], %34 {strides = array<i32>} : memref<16x1xf32, #tpu.memory_space<vmem>>, vector<16x1xf32>,
    return
  }
  func.func @transform_0(%arg0: i32) -> (i32, i32) {
    %c0_i32 = arith.constant 0 : i32
    %c0_i32_0 = arith.constant 0 : i32
    return %arg0, %c0_i32 : i32, i32
  }
  func.func @transform_1(%arg0: i32) -> (i32, i32) {
    %c0_i32 = arith.constant 0 : i32
    %c0_i32_0 = arith.constant 0 : i32
    return %arg0, %c0_i32 : i32, i32
  }
  func.func @transform_2(%arg0: i32) -> (i32, i32) {
    %c0_i32 = arith.constant 0 : i32
    %c0_i32_0 = arith.constant 0 : i32
    %c0_i32_1 = arith.constant 0 : i32
    return %c0_i32, %c0_i32_0 : i32, i32
  }
  func.func @transform_3(%arg0: i32) -> (i32, i32) {
    %c0_i32 = arith.constant 0 : i32
    %c0_i32_0 = arith.constant 0 : i32
    %c0_i32_1 = arith.constant 0 : i32
    return %c0_i32, %c0_i32_0 : i32, i32
  }
  func.func @transform_4(%arg0: i32) -> (i32, i32) {
    %c0_i32 = arith.constant 0 : i32
    %c0_i32_0 = arith.constant 0 : i32
    %c0_i32_1 = arith.constant 0 : i32
    return %c0_i32, %c0_i32_0 : i32, i32
  }
  func.func @transform_5(%arg0: i32) -> (i32, i32) {
    %c0_i32 = arith.constant 0 : i32
    %c0_i32_0 = arith.constant 0 : i32
    %c0_i32_1 = arith.constant 0 : i32
    return %c0_i32, %c0_i32_0 : i32, i32
  }
  func.func @transform_6(%arg0: i32) -> (i32, i32) {
    %c0_i32 = arith.constant 0 : i32
    %c0_i32_0 = arith.constant 0 : i32
    %c0_i32_1 = arith.constant 0 : i32
    return %c0_i32, %c0_i32_0 : i32, i32
  }
  func.func @transform_7(%arg0: i32) -> (i32, i32) {
    %c0_i32 = arith.constant 0 : i32
    %c0_i32_0 = arith.constant 0 : i32
    %c0_i32_1 = arith.constant 0 : i32
    return %c0_i32, %c0_i32_0 : i32, i32
  }
  func.func @transform_8(%arg0: i32) -> (i32, i32) {
    %c0_i32 = arith.constant 0 : i32
    %c0_i32_0 = arith.constant 0 : i32
    %c0_i32_1 = arith.constant 0 : i32
    return %c0_i32, %c0_i32_0 : i32, i32
  }
  func.func @transform_9(%arg0: i32) -> (i32, i32) {
    %c0_i32 = arith.constant 0 : i32
    %c0_i32_0 = arith.constant 0 : i32
    return %arg0, %c0_i32 : i32, i32
  }
}

</mosaic_0001>

<llo_original>
// kernel: tpu_custom_call.1
$region0: #{tpu_custom_call.1}
  #allocation0 [shape = 'u32[]', space=smem, size = 0x4, offset = 0x4, fixed_abs, tag = 'smem constant byte address 0x4 - core index']
  #allocation1 [shape = 'u32[144,128]{1,0:T(1,128)}', space=vmem, size = 0x12000, scoped, tag = 'internal scratch']
  #allocation2 [shape = 'f32[1,1]{1,0:T(1,128)S(1)}', space=vmem, size = 0x200, scoped, tag = 'scoped memory for tpu_custom_call.1']
  %s0 = inlined_call_operand.vmem [shape: f32[16,32], index: 0, kind: input, shape index: {}]
  %s1 = inlined_call_operand.vmem [shape: f32[16,1], index: 1, kind: input, shape index: {}]
  %s2 = inlined_call_operand.hbm [shape: f32[32,256], index: 2, kind: input, shape index: {}]
  %s3 = inlined_call_operand.vmem [shape: f32[1,256], index: 3, kind: input, shape index: {}]
  %s4 = inlined_call_operand.vmem [shape: f32[1,256], index: 4, kind: input, shape index: {}]
  %s5 = inlined_call_operand.hbm [shape: f32[256,128], index: 5, kind: input, shape index: {}]
  %s6 = inlined_call_operand.vmem [shape: f32[1,128], index: 6, kind: input, shape index: {}]
  %s7 = inlined_call_operand.vmem [shape: f32[1,128], index: 7, kind: input, shape index: {}]
  %s8 = inlined_call_operand.<no memory space> [shape: f32[1,1], index: 8, kind: input, shape index: {}]
  %s9 = inlined_call_operand.vmem [shape: f32[16,1], index: 9, kind: output, shape index: {}]
  %s10 = sld [smem:[#allocation0]]
  $region54: #{tpu_custom_call.1} parent=0
    _
  %s12 = ssub.s32 1, %s10
  %s13 = scalar_select 0, %s12, %s10
  %v14 = vstv %s8
  %15 = vst [vmem:[#allocation2] sm:$0x1] %v14
  $region1: #{tpu_custom_call.1} parent=0
    #allocation3 [shape = 'u8[32768]{0}', space=vmem, size = 0x8000, scoped, tag = 'input window, operand 2, single buffered']
    #allocation4 [shape = 's32[1]{0}', space=sflag, size = 0x4, scoped, tag = 'scoped memory for tpu_custom_call.1']
    #allocation5 [shape = 'u8[131072]{0}', space=vmem, size = 0x20000, scoped, tag = 'input window, operand 5, single buffered']
    #allocation6 [shape = 's32[1]{0}', space=sflag, size = 0x4, scoped, tag = 'scoped memory for tpu_custom_call.1']
    %16 = vsyncpa [#allocation4], 0
    %17 = vsyncpa [#allocation6], 0
    // Predicated region
    $region2: #{tpu_custom_call.1} parent=1 // pred_check
      _
    $region3: #{tpu_custom_call.1} parent=1 // pred_check_branch
      %19 = sbr.rel (0) target = $region5
    $region4: #{tpu_custom_call.1} parent=1 // pred_region
      _
    $region5: #{tpu_custom_call.1} parent=1 // pred_fallthru
      _
    // Predicated region
    $region6: #{tpu_custom_call.1} parent=1 // pred_check
      _
    $region7: #{tpu_custom_call.1} parent=1 // pred_check_branch
      %21 = sbr.rel (0) target = $region9
    $region8: #{tpu_custom_call.1} parent=1 // pred_region
      _
    $region9: #{tpu_custom_call.1} parent=1 // pred_fallthru
      _
    // Predicated region
    $region10: #{tpu_custom_call.1} parent=1 // pred_check
      _
    $region11: #{tpu_custom_call.1} parent=1 // pred_check_branch
      %23 = sbr.rel (0) target = $region13
    $region12: #{tpu_custom_call.1} parent=1 // pred_region
      %s25 = ssub.s32 1024, 1024
      %26 = vsyncadd [#allocation4], %s25
      %s27 = sshll.u32 [#allocation3], 4
      %s28 = int_to_ptr.vmem [resolvable:$true] %s27
      %33 = dma.hbm_to_vmem [thread:$0]  %s2, 1024, %s28, [#allocation4], 256, 256, 16
    $region13: #{tpu_custom_call.1} parent=1 // pred_fallthru
      _
    // Predicated region
    $region14: #{tpu_custom_call.1} parent=1 // pred_check
      _
    $region15: #{tpu_custom_call.1} parent=1 // pred_check_branch
      %35 = sbr.rel (0) target = $region17
    $region16: #{tpu_custom_call.1} parent=1 // pred_region
      _
    $region17: #{tpu_custom_call.1} parent=1 // pred_fallthru
      _
    // Predicated region
    $region18: #{tpu_custom_call.1} parent=1 // pred_check
      _
    $region19: #{tpu_custom_call.1} parent=1 // pred_check_branch
      %37 = sbr.rel (0) target = $region21
    $region20: #{tpu_custom_call.1} parent=1 // pred_region
      _
    $region21: #{tpu_custom_call.1} parent=1 // pred_fallthru
      _
    // Predicated region
    $region22: #{tpu_custom_call.1} parent=1 // pred_check
      _
    $region23: #{tpu_custom_call.1} parent=1 // pred_check_branch
      %39 = sbr.rel (0) target = $region25
    $region24: #{tpu_custom_call.1} parent=1 // pred_region
      %s41 = ssub.s32 4096, 4096
      %42 = vsyncadd [#allocation6], %s41
      %s43 = sshll.u32 [#allocation5], 4
      %s44 = int_to_ptr.vmem [resolvable:$true] %s43
      %49 = dma.hbm_to_vmem [thread:$0]  %s5, 4096, %s44, [#allocation6], 128, 128, 8
    $region25: #{tpu_custom_call.1} parent=1 // pred_fallthru
      _
    // Predicated region
    $region26: #{tpu_custom_call.1} parent=1 // pred_check
      _
    $region27: #{tpu_custom_call.1} parent=1 // pred_check_branch
      %51 = sbr.rel (0) target = $region29
    $region28: #{tpu_custom_call.1} parent=1 // pred_region
      _
    $region29: #{tpu_custom_call.1} parent=1 // pred_fallthru
      _
    // Predicated region
    $region30: #{tpu_custom_call.1} parent=1 // pred_check
      _
    $region31: #{tpu_custom_call.1} parent=1 // pred_check_branch
      %53 = sbr.rel (0) target = $region33
    $region32: #{tpu_custom_call.1} parent=1 // pred_region
      _
    $region33: #{tpu_custom_call.1} parent=1 // pred_fallthru
      _
    // Predicated region
    $region34: #{tpu_custom_call.1} parent=1 // pred_check
      _
    $region35: #{tpu_custom_call.1} parent=1 // pred_check_branch
      %55 = sbr.rel (0) target = $region37
    $region36: #{tpu_custom_call.1} parent=1 // pred_region
      _
    $region37: #{tpu_custom_call.1} parent=1 // pred_fallthru
      _
    // Predicated region
    $region38: #{tpu_custom_call.1} parent=1 // pred_check
      _
    $region39: #{tpu_custom_call.1} parent=1 // pred_check_branch
      %57 = sbr.rel (0) target = $region41
    $region40: #{tpu_custom_call.1} parent=1 // pred_region
      %58 = dma.done [#allocation4], 1024
    $region41: #{tpu_custom_call.1} parent=1 // pred_fallthru
      _
    // Predicated region
    $region42: #{tpu_custom_call.1} parent=1 // pred_check
      _
    $region43: #{tpu_custom_call.1} parent=1 // pred_check_branch
      %60 = sbr.rel (0) target = $region45
    $region44: #{tpu_custom_call.1} parent=1 // pred_region
      %61 = dma.done [#allocation6], 4096
    $region45: #{tpu_custom_call.1} parent=1 // pred_fallthru
      _
    %v62 = vld [vmem:[%s0] sm:$0xff]
    %v63 = vld [vmem:[%s0 + $0x8] sm:$0xff]
    %v64 = vld [vmem:[%s1] sm:$0xff]
    %v65 = vld [vmem:[%s1 + $0x8] sm:$0xff]
    %v66 = vld [vmem:[#allocation3] sm:$0xff]
    %v67 = vld [vmem:[#allocation3 + $0x8] sm:$0xff]
    %v68 = vld [vmem:[#allocation3 + $0x10] sm:$0xff]
    %v69 = vld [vmem:[#allocation3 + $0x18] sm:$0xff]
    %v70 = vld [vmem:[#allocation3 + $0x20] sm:$0xff]
    %v71 = vld [vmem:[#allocation3 + $0x28] sm:$0xff]
    %v72 = vld [vmem:[#allocation3 + $0x30] sm:$0xff]
    %v73 = vld [vmem:[#allocation3 + $0x38] sm:$0xff]
    %v74 = vld [vmem:[%s3] sm:$0x3]
    %76 = vset.pattern.permute.xlu0 0
    %77 = vperm.xlu0 %76, %v64
    %v78 = vpop.permute.xlu0 %77
    %81 = vset.pattern.permute.xlu0 0
    %82 = vperm.xlu0 %81, %v65
    %v83 = vpop.permute.xlu0 %82
    %v86 = vlaneseq
    %v87 = vshrl.u32 %v86, 7
    %v88 = vsub.s32 0, %v87
    %v89 = vrot.slane %v74, %v88
    %v90 = vlaneseq
    %v91 = vshrl.u32 %v90, 7
    %v92 = vsub.s32 1, %v91
    %v93 = vrot.slane %v74, %v92
    %v96 = vmul.f32 %v78, %v89
    %v97 = vmul.f32 %v78, %v93
    %v98 = vmul.f32 %v83, %v89
    %v99 = vmul.f32 %v83, %v93
    %vm100 = vcmask 261120
    %v102 = vsel %vm100, %v62, 0
    %v105 = vsel %vm100, %v63, 0
    %107 = vmatprep.subr.mxu0 %v67
    %108 = vmatpush1.msra.mxu0 %v66
    %109 = vmatprep.subr.mxu0 %v69
    %110 = vmatpush1.msra.mxu0 %v68
    %111 = vmatprep.subr.mxu0 %v71
    %112 = vmatpush1.msra.mxu0 %v70
    %113 = vmatprep.subr.mxu0 %v73
    %114 = vmatpush1.msra.mxu0 %v72
    %115 = vmatprep.subr.mxu0 0.0
    %116 = vmatpush1.msra.mxu0 0.0
    %117 = vmatprep.subr.mxu0 0.0
    %118 = vmatpush1.msra.mxu0 0.0
    %119 = vmatprep.subr.mxu0 0.0
    %120 = vmatpush1.msra.mxu0 0.0
    %121 = vmatprep.subr.mxu0 0.0
    %122 = vmatpush1.msra.mxu0 0.0
    %123 = vmatprep.subr.mxu0 0.0
    %124 = vmatpush1.msra.mxu0 0.0
    %125 = vmatprep.subr.mxu0 0.0
    %126 = vmatpush1.msra.mxu0 0.0
    %127 = vmatprep.subr.mxu0 0.0
    %128 = vmatpush1.msra.mxu0 0.0
    %129 = vmatprep.subr.mxu0 0.0
    %130 = vmatpush1.msra.mxu0 0.0
    %131 = vmatprep.subr.mxu0 0.0
    %132 = vmatpush1.msra.mxu0 0.0
    %133 = vmatprep.subr.mxu0 0.0
    %134 = vmatpush1.msra.mxu0 0.0
    %135 = vmatprep.subr.mxu0 0.0
    %136 = vmatpush1.msra.mxu0 0.0
    %137 = vmatprep.subr.mxu0 0.0
    %138 = vmatpush1.msra.mxu0 0.0
    %139 = vmatprep.subr.mxu0 0.0
    %140 = vmatpush1.msra.mxu0 0.0
    %141 = vmatprep.subr.mxu0 0.0
    %142 = vmatpush1.msra.mxu0 0.0
    %143 = vmatprep.subr.mxu0 0.0
    %144 = vmatpush1.msra.mxu0 0.0
    %145 = vmatprep.subr.mxu0 0.0
    %146 = vmatpush1.msra.mxu0 0.0
    %147 = vmatprep.subr.mxu0 0.0
    %148 = vmatpush1.msra.mxu0 0.0
    %149 = vmatprep.subr.mxu0 0.0
    %150 = vmatpush1.msra.mxu0 0.0
    %151 = vmatprep.subr.mxu0 0.0
    %152 = vmatpush1.msra.mxu0 0.0
    %153 = vmatprep.subr.mxu0 0.0
    %154 = vmatpush1.msra.mxu0 0.0
    %155 = vmatprep.subr.mxu0 0.0
    %156 = vmatpush1.msra.mxu0 0.0
    %157 = vmatprep.subr.mxu0 0.0
    %158 = vmatpush1.msra.mxu0 0.0
    %159 = vmatprep.subr.mxu0 0.0
    %160 = vmatpush1.msra.mxu0 0.0
    %161 = vmatprep.subr.mxu0 0.0
    %162 = vmatpush1.msra.mxu0 0.0
    %163 = vmatprep.subr.mxu0 0.0
    %164 = vmatpush1.msra.mxu0 0.0
    %165 = vmatprep.subr.mxu0 0.0
    %166 = vmatpush1.msra.mxu0 0.0
    %167 = vmatprep.subr.mxu0 0.0
    %168 = vmatpush1.msra.mxu0 0.0
    %169 = vmatprep.subr.mxu0 0.0
    %170 = vmatpush1.msra.mxu0 0.0
    %171 = vmatprep.mubr.f32.mxu0 0.0
    %172 = vmatmul.mubr.f32.gmra.mrb[0].mxu0 %v102
    %v173 = vpop.f32.mrb[0].mxu0
    %v174 = vadd.f32 %v96, %v173
    %v175 = vpop.f32.mrb[0].mxu0
    %v176 = vadd.f32 %v97, %v175
    %177 = vmatprep.mubr.f32.mxu0 0.0
    %178 = vmatmul.mubr.f32.gmra.mrb[0].mxu0 %v105
    %v179 = vpop.f32.mrb[0].mxu0
    %v180 = vadd.f32 %v98, %v179
    %v181 = vpop.f32.mrb[0].mxu0
    %v182 = vadd.f32 %v99, %v181
    %183 = vdwg.mxu0
    %v184 = vld [vmem:[%s4] sm:$0x3]
    %v186 = vlaneseq
    %v187 = vshrl.u32 %v186, 7
    %v188 = vsub.s32 0, %v187
    %v189 = vrot.slane %v184, %v188
    %v190 = vlaneseq
    %v191 = vshrl.u32 %v190, 7
    %v192 = vsub.s32 1, %v191
    %v193 = vrot.slane %v184, %v192
    %v196 = vadd.f32 %v174, %v189
    %v197 = vadd.f32 %v176, %v193
    %v198 = vadd.f32 %v180, %v189
    %v199 = vadd.f32 %v182, %v193
    %vm200 = vcmp.gt.f32.partialorder %v196, 0.0
    %vm201 = vcmp.gt.f32.partialorder %v197, 0.0
    %vm202 = vcmp.gt.f32.partialorder %v198, 0.0
    %vm203 = vcmp.gt.f32.partialorder %v199, 0.0
    %v204 = vmul.f32 %v196, 0.01
    %v205 = vmul.f32 %v197, 0.01
    %v206 = vmul.f32 %v198, 0.01
    %v207 = vmul.f32 %v199, 0.01
    %v208 = vsel %vm200, %v196, %v204
    %v209 = vsel %vm201, %v197, %v205
    %v210 = vsel %vm202, %v198, %v206
    %v211 = vsel %vm203, %v199, %v207
    %v212 = vld [vmem:[#allocation5] sm:$0xff]
    %v213 = vld [vmem:[#allocation5 + $0x8] sm:$0xff]
    %v214 = vld [vmem:[#allocation5 + $0x10] sm:$0xff]
    %v215 = vld [vmem:[#allocation5 + $0x18] sm:$0xff]
    %v216 = vld [vmem:[#allocation5 + $0x20] sm:$0xff]
    %v217 = vld [vmem:[#allocation5 + $0x28] sm:$0xff]
    %v218 = vld [vmem:[#allocation5 + $0x30] sm:$0xff]
    %v219 = vld [vmem:[#allocation5 + $0x38] sm:$0xff]
    %v220 = vld [vmem:[#allocation5 + $0x40] sm:$0xff]
    %v221 = vld [vmem:[#allocation5 + $0x48] sm:$0xff]
    %v222 = vld [vmem:[#allocation5 + $0x50] sm:$0xff]
    %v223 = vld [vmem:[#allocation5 + $0x58] sm:$0xff]
    %v224 = vld [vmem:[#allocation5 + $0x60] sm:$0xff]
    %v225 = vld [vmem:[#allocation5 + $0x68] sm:$0xff]
    %v226 = vld [vmem:[#allocation5 + $0x70] sm:$0xff]
    %v227 = vld [vmem:[#allocation5 + $0x78] sm:$0xff]
    %v228 = vld [vmem:[#allocation5 + $0x80] sm:$0xff]
    %v229 = vld [vmem:[#allocation5 + $0x88] sm:$0xff]
    %v230 = vld [vmem:[#allocation5 + $0x90] sm:$0xff]
    %v231 = vld [vmem:[#allocation5 + $0x98] sm:$0xff]
    %v232 = vld [vmem:[#allocation5 + $0xa0] sm:$0xff]
    %v233 = vld [vmem:[#allocation5 + $0xa8] sm:$0xff]
    %v234 = vld [vmem:[#allocation5 + $0xb0] sm:$0xff]
    %v235 = vld [vmem:[#allocation5 + $0xb8] sm:$0xff]
    %v236 = vld [vmem:[#allocation5 + $0xc0] sm:$0xff]
    %v237 = vld [vmem:[#allocation5 + $0xc8] sm:$0xff]
    %v238 = vld [vmem:[#allocation5 + $0xd0] sm:$0xff]
    %v239 = vld [vmem:[#allocation5 + $0xd8] sm:$0xff]
    %v240 = vld [vmem:[#allocation5 + $0xe0] sm:$0xff]
    %v241 = vld [vmem:[#allocation5 + $0xe8] sm:$0xff]
    %v242 = vld [vmem:[#allocation5 + $0xf0] sm:$0xff]
    %v243 = vld [vmem:[#allocation5 + $0xf8] sm:$0xff]
    %v244 = vld [vmem:[%s6] sm:$0x1]
    %v246 = vlaneseq
    %v247 = vshrl.u32 %v246, 7
    %v248 = vsub.s32 0, %v247
    %v249 = vrot.slane %v244, %v248
    %251 = vmatprep.subr.mxu0 0.0
    %252 = vmatpush1.msra.mxu0 %v212
    %253 = vmatprep.subr.mxu0 0.0
    %254 = vmatpush1.msra.mxu0 %v213
    %255 = vmatprep.subr.mxu0 0.0
    %256 = vmatpush1.msra.mxu0 %v214
    %257 = vmatprep.subr.mxu0 0.0
    %258 = vmatpush1.msra.mxu0 %v215
    %259 = vmatprep.subr.mxu0 0.0
    %260 = vmatpush1.msra.mxu0 %v216
    %261 = vmatprep.subr.mxu0 0.0
    %262 = vmatpush1.msra.mxu0 %v217
    %263 = vmatprep.subr.mxu0 0.0
    %264 = vmatpush1.msra.mxu0 %v218
    %265 = vmatprep.subr.mxu0 0.0
    %266 = vmatpush1.msra.mxu0 %v219
    %267 = vmatprep.subr.mxu0 0.0
    %268 = vmatpush1.msra.mxu0 %v220
    %269 = vmatprep.subr.mxu0 0.0
    %270 = vmatpush1.msra.mxu0 %v221
    %271 = vmatprep.subr.mxu0 0.0
    %272 = vmatpush1.msra.mxu0 %v222
    %273 = vmatprep.subr.mxu0 0.0
    %274 = vmatpush1.msra.mxu0 %v223
    %275 = vmatprep.subr.mxu0 0.0
    %276 = vmatpush1.msra.mxu0 %v224
    %277 = vmatprep.subr.mxu0 0.0
    %278 = vmatpush1.msra.mxu0 %v225
    %279 = vmatprep.subr.mxu0 0.0
    %280 = vmatpush1.msra.mxu0 %v226
    %281 = vmatprep.subr.mxu0 0.0
    %282 = vmatpush1.msra.mxu0 %v227
    %283 = vmatprep.subr.mxu0 0.0
    %284 = vmatpush1.msra.mxu0 %v228
    %285 = vmatprep.subr.mxu0 0.0
    %286 = vmatpush1.msra.mxu0 %v229
    %287 = vmatprep.subr.mxu0 0.0
    %288 = vmatpush1.msra.mxu0 %v230
    %289 = vmatprep.subr.mxu0 0.0
    %290 = vmatpush1.msra.mxu0 %v231
    %291 = vmatprep.subr.mxu0 0.0
    %292 = vmatpush1.msra.mxu0 %v232
    %293 = vmatprep.subr.mxu0 0.0
    %294 = vmatpush1.msra.mxu0 %v233
    %295 = vmatprep.subr.mxu0 0.0
    %296 = vmatpush1.msra.mxu0 %v234
    %297 = vmatprep.subr.mxu0 0.0
    %298 = vmatpush1.msra.mxu0 %v235
    %299 = vmatprep.subr.mxu0 0.0
    %300 = vmatpush1.msra.mxu0 %v236
    %301 = vmatprep.subr.mxu0 0.0
    %302 = vmatpush1.msra.mxu0 %v237
    %303 = vmatprep.subr.mxu0 0.0
    %304 = vmatpush1.msra.mxu0 %v238
    %305 = vmatprep.subr.mxu0 0.0
    %306 = vmatpush1.msra.mxu0 %v239
    %307 = vmatprep.subr.mxu0 0.0
    %308 = vmatpush1.msra.mxu0 %v240
    %309 = vmatprep.subr.mxu0 0.0
    %310 = vmatpush1.msra.mxu0 %v241
    %311 = vmatprep.subr.mxu0 0.0
    %312 = vmatpush1.msra.mxu0 %v242
    %313 = vmatprep.subr.mxu0 0.0
    %314 = vmatpush1.msra.mxu0 %v243
    %315 = vmatprep.mubr.f32.mxu0 %v209
    %316 = vmatmul.mubr.f32.gmra.mrb[0].mxu0 %v208
    %v317 = vpop.f32.mrb[0].mxu0
    %v318 = vadd.f32 %v249, %v317
    %v319 = vpop.f32.mrb[0].mxu0
    %320 = vmatprep.mubr.f32.mxu0 %v211
    %321 = vmatmul.mubr.f32.gmra.mrb[0].mxu0 %v210
    %v322 = vpop.f32.mrb[0].mxu0
    %v323 = vadd.f32 %v249, %v322
    %v324 = vpop.f32.mrb[0].mxu0
    %325 = vdwg.mxu0
    %vm326 = vcmp.gt.f32.partialorder %v318, 0.0
    %vm327 = vcmp.gt.f32.partialorder %v323, 0.0
    %v328 = vmul.f32 %v318, 0.01
    %v329 = vmul.f32 %v323, 0.01
    %v330 = vsel %vm326, %v318, %v328
    %v331 = vsel %vm327, %v323, %v329
    %v332 = vld [vmem:[%s7] sm:$0x1]
    %v334 = vlaneseq
    %v335 = vshrl.u32 %v334, 7
    %v336 = vsub.s32 0, %v335
    %v337 = vrot.slane %v332, %v336
    %v339 = vmul.f32 %v330, %v337
    %v340 = vmul.f32 %v331, %v337
    %341 = vadd.xlane.f32.xlu0 %v339
    %v342 = vpop.xlane.xlu0 %341
    %343 = vadd.xlane.f32.xlu0 %v340
    %v344 = vpop.xlane.xlu0 %343
    %v345 = vld [vmem:[#allocation2] sm:$0x1]
    %v347 = vlaneseq
    %v348 = vshrl.u32 %v347, 7
    %v349 = vsub.s32 0, %v348
    %v350 = vrot.slane %v345, %v349
    %v352 = vadd.f32 %v342, %v350
    %v353 = vadd.f32 %v344, %v350
    %vm354 = vcmask 7168
    %355 = vst.msk [vmem:[%s9] sm:$0xff] %vm354, %v352
    %356 = vst.msk [vmem:[%s9 + $0x8] sm:$0xff] %vm354, %v353
    // Predicated region
    $region46: #{tpu_custom_call.1} parent=1 // pred_check
      _
    $region47: #{tpu_custom_call.1} parent=1 // pred_check_branch
      %358 = sbr.rel (0) target = $region49
    $region48: #{tpu_custom_call.1} parent=1 // pred_region
      _
    $region49: #{tpu_custom_call.1} parent=1 // pred_fallthru
      _
    // Predicated region
    $region50: #{tpu_custom_call.1} parent=1 // pred_check
      _
    $region51: #{tpu_custom_call.1} parent=1 // pred_check_branch
      %360 = sbr.rel (0) target = $region53
    $region52: #{tpu_custom_call.1} parent=1 // pred_region
      _
    $region53: #{tpu_custom_call.1} parent=1 // pred_fallthru
      _
    %361 = vsyncpa [#allocation4], 1
    %362 = vsyncpa [#allocation6], 1

</llo_original>
